<compile_context>
chip_gen: v7x
topology: tpu7x:2x2x1
jax: 0.10.0
libtpu: 0.0.40
codegen_flags: <defaults>
</compile_context>

<pallas_src>
import functools

import numpy as np
import jax
import jax.numpy as jnp
from jax.experimental import pallas as pl
from jax.experimental.pallas import tpu as pltpu


def _round_up(n, m):
    return ((n + m - 1) // m) * m


def _point_embed_kernel(pkeys_ref, nkeys_ref, tableT_ref, out_ref, *,
                        chunk, accumulate):
    # pkeys_ref : (1, TN)   int32 packed point keys (pad = -2, never matches)
    # nkeys_ref : (MT, 1)   int32 packed node keys  (pad = -1, never matches)
    # tableT_ref: (Ep, MT)  f32   transposed embedding table tile (pad = 0)
    # out_ref   : (Ep, TN)  f32   embedded points, transposed (lane-dense stores)
    nk = nkeys_ref[...]                       # hoisted: reused by every chunk
    tT = tableT_ref[...]
    tn = out_ref.shape[1]

    if accumulate:
        # output block is resident across the node ("arbitrary") grid axis
        @pl.when(pl.program_id(1) == 0)
        def _init():
            out_ref[...] = jnp.zeros_like(out_ref)

    # Chunk the point (lane) axis so the (MT, chunk) one-hot never spills
    # through VMEM; the VPU compare of chunk c+1 overlaps the MXU on chunk c.
    for lo in range(0, tn, chunk):
        pk = pkeys_ref[:, lo:lo + chunk]                       # (1, chunk)
        onehot = (nk == pk).astype(jnp.float32)                # (MT, chunk)
        part = jnp.dot(tT, onehot, preferred_element_type=jnp.float32)
        if accumulate:
            out_ref[:, lo:lo + chunk] += part                  # disjoint -> exact
        else:
            out_ref[:, lo:lo + chunk] = part


def point_embedding(points, embed_table, *, tile_n=2048, min_steps=4,
                    node_tile=1024):
    """points: (N, 2) float; embed_table: (max_len, E) float32.
    Returns (N, E) float32: embedding row of each point's sorted-unique index."""
    max_len, E = embed_table.shape

    # The unique-node discovery is a data-dependent, stateful host operation in
    # the torch module (while-loop + torch.unique); it has no Pallas form, so a
    # single device->host pull of the points is inherent here.
    # TODO(synk): cache node_keys/ux/uy across calls (matches the torch
    # module's stateful node growth) instead of recomputing per call.
    pts_np = np.asarray(points, dtype=np.float32)
    N = int(pts_np.shape[0])

    # --- quantize to the 1e-4 grid and pack each point into ONE int32 key -----
    q = np.round(pts_np * 1e4).astype(np.int64)                      # (N, 2)
    ux = np.unique(q[:, 0])
    uy = np.unique(q[:, 1])
    assert int(len(ux)) * int(len(uy)) < 2**31, \
        "packed point key overflows int32 (table resolution too large)"
    keys = (np.searchsorted(ux, q[:, 0]).astype(np.int64) * len(uy)
            + np.searchsorted(uy, q[:, 1]))
    # key order is lexicographic in (x, y) == torch.unique(dim=0) node order.

    # --- node-table build (mirrors PointEmbedding._add_nodes) -----------------
    # TODO(synk): the torch module grows `nodes` across calls; here the table is
    # rebuilt per call from the current batch, matching a fresh module's first
    # forward pass.
    node_keys = np.unique(keys) if N > 0 else np.zeros((0,), np.int64)
    n_uniq = int(node_keys.shape[0])
    assert n_uniq <= max_len, "PointEmbedding resolution exceeded"

    # --- point-axis tiling: balanced TN from N, >= min_steps steps when useful -
    g = max(pl.cdiv(max(N, 1), tile_n),
            min(min_steps, pl.cdiv(max(N, 1), 128)), 1)
    TN = _round_up(pl.cdiv(max(N, 1), g), 128)
    Np = g * TN

    # --- node-axis tiling (keeps large `resolution` inside VMEM) --------------
    Mp0 = _round_up(max(n_uniq, 1), 128)
    n_node_tiles = pl.cdiv(Mp0, node_tile)
    MT = _round_up(pl.cdiv(Mp0, n_node_tiles), 128)
    Mp = n_node_tiles * MT
    Ep = _round_up(E, 8)

    # in-kernel chunk of the point (lane) axis: 512/256/128, must divide TN
    chunk = 128
    for cand in (512, 256, 128):
        if TN % cand == 0:
            chunk = cand
            break

    # --- padded host buffers ---------------------------------------------------
    pkeys = np.full((1, Np), -2, dtype=np.int32)      # -2 never matches anything
    if N > 0:
        pkeys[0, :N] = keys.astype(np.int32)
    nkeys = np.full((Mp, 1), -1, dtype=np.int32)      # -1 never matches a point
    nkeys[:n_uniq, 0] = node_keys.astype(np.int32)

    tableT = np.zeros((Ep, Mp), np.float32)
    tableT[:E, :n_uniq] = np.asarray(embed_table, np.float32)[:n_uniq].T

    # --- explicit VMEM budget + cost estimate ----------------------------------
    vmem_bytes = (2 * TN * 4                 # pkeys stream (double-buffered)
                  + 2 * MT * 128 * 4         # nkeys (lane-padded) buffers
                  + 2 * Ep * MT * 4          # tableT buffers
                  + 2 * Ep * TN * 4          # output block (double-buffered)
                  + 2 * MT * chunk * 4)      # in-kernel one-hot temporaries
    vmem_limit = int(min(64 << 20, max(vmem_bytes + (4 << 20), 32 << 20)))
    cost = pl.CostEstimate(
        flops=2 * Ep * Mp * Np,
        transcendentals=0,
        bytes_accessed=int(4 * (Np + Mp + Ep * Mp + Ep * Np)))

    kernel = functools.partial(_point_embed_kernel, chunk=chunk,
                               accumulate=(n_node_tiles > 1))

    def _run(single_buffer_invariants):
        if single_buffer_invariants:
            # node keys / table^T never change across the grid -> one buffer
            nkeys_spec = pl.BlockSpec((MT, 1), lambda i, j: (j, 0),
                                      pipeline_mode=pl.Buffered(1))
            table_spec = pl.BlockSpec((Ep, MT), lambda i, j: (0, j),
                                      pipeline_mode=pl.Buffered(1))
        else:
            nkeys_spec = pl.BlockSpec((MT, 1), lambda i, j: (j, 0))
            table_spec = pl.BlockSpec((Ep, MT), lambda i, j: (0, j))
        return pl.pallas_call(
            kernel,
            out_shape=jax.ShapeDtypeStruct((Ep, Np), jnp.float32),
            grid=(g, n_node_tiles),
            in_specs=[
                pl.BlockSpec((1, TN), lambda i, j: (0, i)),   # streamed point keys
                nkeys_spec,                                   # node keys
                table_spec,                                   # table^T tile
            ],
            out_specs=pl.BlockSpec((Ep, TN), lambda i, j: (0, i)),
            compiler_params=pltpu.CompilerParams(
                dimension_semantics=("parallel", "arbitrary"),
                vmem_limit_bytes=vmem_limit),
            cost_estimate=cost,
        )(jnp.asarray(pkeys), jnp.asarray(nkeys), jnp.asarray(tableT))

    try:
        out = _run(n_node_tiles == 1)
    except Exception:
        # fallback if pipeline_mode=pl.Buffered(1) is unsupported in this jax
        out = _run(False)

    # slice the padding off first, then transpose (fuses into downstream concat)
    return out[:E, :N].T                                  # (N, E)


def matrix_position_embedder(x, pos_cols, embed_table):
    """x: (*batch, F) float; pos_cols: list of column indices p (uses cols p, p+1)
       returns (*batch, F + len(pos_cols) * embed_size)"""
    x = jnp.asarray(x, dtype=jnp.float32)
    orig_shape = x.shape
    pos_pairs = np.array([[p, p + 1] for p in pos_cols], dtype=np.int32)  # (P, 2)
    to_embed = x[..., pos_pairs]                          # (*batch, P, 2)
    points = to_embed.reshape(-1, 2)
    embedded = point_embedding(points, embed_table)       # (N, E)
    back = embedded.reshape(orig_shape[:-1] + (-1,))      # (*batch, P*E)
    return jnp.concatenate([x, back], axis=-1)


def _reference(x, pos_cols, embed_table):
    """Plain numpy re-implementation of the torch forward (fresh module)."""
    x = np.asarray(x, dtype=np.float32)
    table = np.asarray(embed_table, dtype=np.float32)
    pos_pairs = np.array([[p, p + 1] for p in pos_cols], dtype=np.int64)
    pts = x[..., pos_pairs].reshape(-1, 2)
    pts = np.round(pts * 1e4) / 1e4
    uniq = np.unique(pts, axis=0)
    idx = np.zeros(pts.shape[0], dtype=np.int64)
    for n in range(pts.shape[0]):
        idx[n] = np.where(np.all(uniq == pts[n], axis=1))[0][0]
    emb = table[idx].reshape(x.shape[:-1] + (-1,))
    return np.concatenate([x, emb], axis=-1)


if __name__ == "__main__":
    key = jax.random.PRNGKey(0)
    kx, kt = jax.random.split(key)

    embed_size = 4
    resolution = 200                      # module default max_len
    batch, seq, feat = 2, 3, 8
    pos_cols = [0, 4]                     # embeds column pairs (0,1) and (4,5)

    # position-like features on a coarse 0.5 grid so duplicate points occur
    x = jnp.round(jax.random.uniform(kx, (batch, seq, feat),
                                     minval=0.0, maxval=4.0) * 2.0) / 2.0
    # deterministic nn.Embedding weight: N(0, 1)
    embed_table = jax.random.normal(kt, (resolution, embed_size), dtype=jnp.float32)

    out = matrix_position_embedder(x, pos_cols, embed_table)
    out = jax.block_until_ready(out)

    ref = _reference(x, pos_cols, embed_table)
    assert out.shape == (batch, seq, feat + len(pos_cols) * embed_size), out.shape
    np.testing.assert_allclose(np.asarray(out), ref, rtol=1e-6, atol=1e-6)

    print("KERNEL_OK")
</pallas_src>

<mosaic_0001>
module attributes {stable_mosaic.version = 11 : i64} {
  func.func @_point_embed_kernel(%arg0: i32, %arg1: i32, %arg2: memref<1x128xi32, #tpu.memory_space<vmem>>, %arg3: memref<128x1xi32, #tpu.memory_space<vmem>>, %arg4: memref<8x128xf32, #tpu.memory_space<vmem>>, %arg5: memref<8x128xf32, #tpu.memory_space<vmem>>) attributes {dimension_semantics = [#tpu.dimension_semantics<parallel>, #tpu.dimension_semantics<arbitrary>], iteration_bounds = array<i64: 1, 1>, scalar_prefetch = 0 : i64, scratch_operands = 0 : i64, tpu.core_type = #tpu.core_type<tc>, window_params = [{transform_indices = @transform_0, window_bounds = array<i64: 1, 128>}, {pipeline_mode = #tpu.pipeline_mode<synchronous>, transform_indices = @transform_1, window_bounds = array<i64: 128, 1>}, {pipeline_mode = #tpu.pipeline_mode<synchronous>, transform_indices = @transform_2, window_bounds = array<i64: 8, 128>}, {transform_indices = @transform_3, window_bounds = array<i64: 8, 128>}]} {
    %c0 = arith.constant 0 : index
    %c0_0 = arith.constant 0 : index
    %0 = vector.load %arg3[%c0, %c0_0] : memref<128x1xi32, #tpu.memory_space<vmem>>, vector<128x1xi32>
    %c0_1 = arith.constant 0 : index
    %c0_2 = arith.constant 0 : index
    %1 = vector.load %arg4[%c0_1, %c0_2] : memref<8x128xf32, #tpu.memory_space<vmem>>, vector<8x128xf32>
    %c0_3 = arith.constant 0 : index
    %c0_4 = arith.constant 0 : index
    %2 = vector.load %arg2[%c0_3, %c0_4] : memref<1x128xi32, #tpu.memory_space<vmem>>, vector<1x128xi32>
    %3 = vector.broadcast %0 : vector<128x1xi32> to vector<128x128xi32>
    %4 = vector.broadcast %2 : vector<1x128xi32> to vector<128x128xi32>
    %5 = arith.cmpi eq, %3, %4 : vector<128x128xi32>
    %6 = arith.extui %5 : vector<128x128xi1> to vector<128x128xi32>
    %7 = arith.sitofp %6 : vector<128x128xi32> to vector<128x128xf32>
    %cst = arith.constant dense<0.000000e+00> : vector<8x128xf32>
    %8 = tpu.matmul %1, %7, %cst {dimension_numbers = #tpu.dot_dimension_numbers<[1], [0], [0], [1], [0, 0, 1, 1], [], []>} : vector<8x128xf32>, vector<128x128xf32>, vector<8x128xf32> -> vector<8x128xf32>
    %c0_5 = arith.constant 0 : index
    %c0_6 = arith.constant 0 : index
    %9 = vector.load %arg5[%c0_5, %c0_6] : memref<8x128xf32, #tpu.memory_space<vmem>>, vector<8x128xf32>
    tpu.vector_store %arg5[%c0_5, %c0_6], %8 {strides = array<i32>} : memref<8x128xf32, #tpu.memory_space<vmem>>, vector<8x128xf32>,
    return
  }
  func.func @transform_0(%arg0: i32, %arg1: i32) -> (i32, i32) {
    %c0_i32 = arith.constant 0 : i32
    %c0_i32_0 = arith.constant 0 : i32
    return %c0_i32, %arg0 : i32, i32
  }
  func.func @transform_1(%arg0: i32, %arg1: i32) -> (i32, i32) {
    %c0_i32 = arith.constant 0 : i32
    %c0_i32_0 = arith.constant 0 : i32
    return %arg1, %c0_i32 : i32, i32
  }
  func.func @transform_2(%arg0: i32, %arg1: i32) -> (i32, i32) {
    %c0_i32 = arith.constant 0 : i32
    %c0_i32_0 = arith.constant 0 : i32
    return %c0_i32, %arg1 : i32, i32
  }
  func.func @transform_3(%arg0: i32, %arg1: i32) -> (i32, i32) {
    %c0_i32 = arith.constant 0 : i32
    %c0_i32_0 = arith.constant 0 : i32
    return %c0_i32, %arg0 : i32, i32
  }
}

module attributes {stable_mosaic.version = 11 : i64} {
  func.func @_point_embed_kernel(%arg0: i32, %arg1: i32, %arg2: memref<1x128xi32, #tpu.memory_space<vmem>>, %arg3: memref<128x1xi32, #tpu.memory_space<vmem>>, %arg4: memref<8x128xf32, #tpu.memory_space<vmem>>, %arg5: memref<8x128xf32, #tpu.memory_space<vmem>>) attributes {dimension_semantics = [#tpu.dimension_semantics<parallel>, #tpu.dimension_semantics<arbitrary>], iteration_bounds = array<i64: 1, 1>, scalar_prefetch = 0 : i64, scratch_operands = 0 : i64, tpu.core_type = #tpu.core_type<tc>, window_params = [{transform_indices = @transform_0, window_bounds = array<i64: 1, 128>}, {transform_indices = @transform_1, window_bounds = array<i64: 128, 1>}, {transform_indices = @transform_2, window_bounds = array<i64: 8, 128>}, {transform_indices = @transform_3, window_bounds = array<i64: 8, 128>}]} {
    %c0 = arith.constant 0 : index
    %c0_0 = arith.constant 0 : index
    %0 = vector.load %arg3[%c0, %c0_0] : memref<128x1xi32, #tpu.memory_space<vmem>>, vector<128x1xi32>
    %c0_1 = arith.constant 0 : index
    %c0_2 = arith.constant 0 : index
    %1 = vector.load %arg4[%c0_1, %c0_2] : memref<8x128xf32, #tpu.memory_space<vmem>>, vector<8x128xf32>
    %c0_3 = arith.constant 0 : index
    %c0_4 = arith.constant 0 : index
    %2 = vector.load %arg2[%c0_3, %c0_4] : memref<1x128xi32, #tpu.memory_space<vmem>>, vector<1x128xi32>
    %3 = vector.broadcast %0 : vector<128x1xi32> to vector<128x128xi32>
    %4 = vector.broadcast %2 : vector<1x128xi32> to vector<128x128xi32>
    %5 = arith.cmpi eq, %3, %4 : vector<128x128xi32>
    %6 = arith.extui %5 : vector<128x128xi1> to vector<128x128xi32>
    %7 = arith.sitofp %6 : vector<128x128xi32> to vector<128x128xf32>
    %cst = arith.constant dense<0.000000e+00> : vector<8x128xf32>
    %8 = tpu.matmul %1, %7, %cst {dimension_numbers = #tpu.dot_dimension_numbers<[1], [0], [0], [1], [0, 0, 1, 1], [], []>} : vector<8x128xf32>, vector<128x128xf32>, vector<8x128xf32> -> vector<8x128xf32>
    %c0_5 = arith.constant 0 : index
    %c0_6 = arith.constant 0 : index
    %9 = vector.load %arg5[%c0_5, %c0_6] : memref<8x128xf32, #tpu.memory_space<vmem>>, vector<8x128xf32>
    tpu.vector_store %arg5[%c0_5, %c0_6], %8 {strides = array<i32>} : memref<8x128xf32, #tpu.memory_space<vmem>>, vector<8x128xf32>,
    return
  }
  func.func @transform_0(%arg0: i32, %arg1: i32) -> (i32, i32) {
    %c0_i32 = arith.constant 0 : i32
    %c0_i32_0 = arith.constant 0 : i32
    return %c0_i32, %arg0 : i32, i32
  }
  func.func @transform_1(%arg0: i32, %arg1: i32) -> (i32, i32) {
    %c0_i32 = arith.constant 0 : i32
    %c0_i32_0 = arith.constant 0 : i32
    return %arg1, %c0_i32 : i32, i32
  }
  func.func @transform_2(%arg0: i32, %arg1: i32) -> (i32, i32) {
    %c0_i32 = arith.constant 0 : i32
    %c0_i32_0 = arith.constant 0 : i32
    return %c0_i32, %arg1 : i32, i32
  }
  func.func @transform_3(%arg0: i32, %arg1: i32) -> (i32, i32) {
    %c0_i32 = arith.constant 0 : i32
    %c0_i32_0 = arith.constant 0 : i32
    return %c0_i32, %arg0 : i32, i32
  }
}

</mosaic_0001>

<llo_original>
// kernel: tpu_custom_call.1
$region0: #{tpu_custom_call.1}
  #allocation0 [shape = 'u32[]', space=smem, size = 0x4, offset = 0x4, fixed_abs, tag = 'smem constant byte address 0x4 - core index']
  #allocation1 [shape = 'u32[144,128]{1,0:T(1,128)}', space=vmem, size = 0x12000, scoped, tag = 'internal scratch']
  %s0 = inlined_call_operand.vmem [shape: s32[1,128], index: 0, kind: input, shape index: {}]
  %s1 = inlined_call_operand.vmem [shape: s32[128,1], index: 1, kind: input, shape index: {}]
  %s2 = inlined_call_operand.vmem [shape: f32[8,128], index: 2, kind: input, shape index: {}]
  %s3 = inlined_call_operand.hbm [shape: f32[8,128], index: 3, kind: output, shape index: {}]
  %s4 = sld [smem:[#allocation0]]
  $region22: #{tpu_custom_call.1} parent=0
    _
  %s6 = ssub.s32 1, %s4
  %s7 = scalar_select 0, %s6, %s4
  $region1: #{tpu_custom_call.1} parent=0
    #allocation2 [shape = 'u8[4096]{0}', space=vmem, size = 0x1000, scoped, tag = 'output window, operand 0, single buffered']
    #allocation3 [shape = 's32[1]{0}', space=sflag, size = 0x4, scoped, tag = 'scoped memory for tpu_custom_call.1']
    %8 = vsyncpa [#allocation3], 0
    // Predicated region
    $region2: #{tpu_custom_call.1} parent=1 // pred_check
      _
    $region3: #{tpu_custom_call.1} parent=1 // pred_check_branch
      %10 = sbr.rel (0) target = $region5
    $region4: #{tpu_custom_call.1} parent=1 // pred_region
      _
    $region5: #{tpu_custom_call.1} parent=1 // pred_fallthru
      _
    // Predicated region
    $region6: #{tpu_custom_call.1} parent=1 // pred_check
      _
    $region7: #{tpu_custom_call.1} parent=1 // pred_check_branch
      %12 = sbr.rel (0) target = $region9
    $region8: #{tpu_custom_call.1} parent=1 // pred_region
      _
    $region9: #{tpu_custom_call.1} parent=1 // pred_fallthru
      _
    // Predicated region
    $region10: #{tpu_custom_call.1} parent=1 // pred_check
      _
    $region11: #{tpu_custom_call.1} parent=1 // pred_check_branch
      %14 = sbr.rel (0) target = $region13
    $region12: #{tpu_custom_call.1} parent=1 // pred_region
      _
    $region13: #{tpu_custom_call.1} parent=1 // pred_fallthru
      _
    %v15 = vld [vmem:[%s1] sm:$0xff]
    %v16 = vld [vmem:[%s1 + $0x8] sm:$0xff]
    %v17 = vld [vmem:[%s1 + $0x10] sm:$0xff]
    %v18 = vld [vmem:[%s1 + $0x18] sm:$0xff]
    %v19 = vld [vmem:[%s1 + $0x20] sm:$0xff]
    %v20 = vld [vmem:[%s1 + $0x28] sm:$0xff]
    %v21 = vld [vmem:[%s1 + $0x30] sm:$0xff]
    %v22 = vld [vmem:[%s1 + $0x38] sm:$0xff]
    %v23 = vld [vmem:[%s1 + $0x40] sm:$0xff]
    %v24 = vld [vmem:[%s1 + $0x48] sm:$0xff]
    %v25 = vld [vmem:[%s1 + $0x50] sm:$0xff]
    %v26 = vld [vmem:[%s1 + $0x58] sm:$0xff]
    %v27 = vld [vmem:[%s1 + $0x60] sm:$0xff]
    %v28 = vld [vmem:[%s1 + $0x68] sm:$0xff]
    %v29 = vld [vmem:[%s1 + $0x70] sm:$0xff]
    %v30 = vld [vmem:[%s1 + $0x78] sm:$0xff]
    %v31 = vld [vmem:[%s2] sm:$0xff]
    %v32 = vld [vmem:[%s0] sm:$0x1]
    %33 = vset.pattern.permute.xlu0 0
    %34 = vperm.xlu0 %33, %v15
    %v35 = vpop.permute.xlu0 %34
    %36 = vset.pattern.permute.xlu0 0
    %37 = vperm.xlu0 %36, %v16
    %v38 = vpop.permute.xlu0 %37
    %39 = vset.pattern.permute.xlu0 0
    %40 = vperm.xlu0 %39, %v17
    %v41 = vpop.permute.xlu0 %40
    %42 = vset.pattern.permute.xlu0 0
    %43 = vperm.xlu0 %42, %v18
    %v44 = vpop.permute.xlu0 %43
    %45 = vset.pattern.permute.xlu0 0
    %46 = vperm.xlu0 %45, %v19
    %v47 = vpop.permute.xlu0 %46
    %48 = vset.pattern.permute.xlu0 0
    %49 = vperm.xlu0 %48, %v20
    %v50 = vpop.permute.xlu0 %49
    %51 = vset.pattern.permute.xlu0 0
    %52 = vperm.xlu0 %51, %v21
    %v53 = vpop.permute.xlu0 %52
    %54 = vset.pattern.permute.xlu0 0
    %55 = vperm.xlu0 %54, %v22
    %v56 = vpop.permute.xlu0 %55
    %57 = vset.pattern.permute.xlu0 0
    %58 = vperm.xlu0 %57, %v23
    %v59 = vpop.permute.xlu0 %58
    %60 = vset.pattern.permute.xlu0 0
    %61 = vperm.xlu0 %60, %v24
    %v62 = vpop.permute.xlu0 %61
    %63 = vset.pattern.permute.xlu0 0
    %64 = vperm.xlu0 %63, %v25
    %v65 = vpop.permute.xlu0 %64
    %66 = vset.pattern.permute.xlu0 0
    %67 = vperm.xlu0 %66, %v26
    %v68 = vpop.permute.xlu0 %67
    %69 = vset.pattern.permute.xlu0 0
    %70 = vperm.xlu0 %69, %v27
    %v71 = vpop.permute.xlu0 %70
    %72 = vset.pattern.permute.xlu0 0
    %73 = vperm.xlu0 %72, %v28
    %v74 = vpop.permute.xlu0 %73
    %75 = vset.pattern.permute.xlu0 0
    %76 = vperm.xlu0 %75, %v29
    %v77 = vpop.permute.xlu0 %76
    %78 = vset.pattern.permute.xlu0 0
    %79 = vperm.xlu0 %78, %v30
    %v80 = vpop.permute.xlu0 %79
    %v81 = vlaneseq
    %v82 = vshrl.u32 %v81, 7
    %v83 = vsub.s32 0, %v82
    %v84 = vrot.slane %v32, %v83
    %vm85 = vcmp.eq.s32.totalorder %v35, %v84
    %vm86 = vcmp.eq.s32.totalorder %v38, %v84
    %vm87 = vcmp.eq.s32.totalorder %v41, %v84
    %vm88 = vcmp.eq.s32.totalorder %v44, %v84
    %vm89 = vcmp.eq.s32.totalorder %v47, %v84
    %vm90 = vcmp.eq.s32.totalorder %v50, %v84
    %vm91 = vcmp.eq.s32.totalorder %v53, %v84
    %vm92 = vcmp.eq.s32.totalorder %v56, %v84
    %vm93 = vcmp.eq.s32.totalorder %v59, %v84
    %vm94 = vcmp.eq.s32.totalorder %v62, %v84
    %vm95 = vcmp.eq.s32.totalorder %v65, %v84
    %vm96 = vcmp.eq.s32.totalorder %v68, %v84
    %vm97 = vcmp.eq.s32.totalorder %v71, %v84
    %vm98 = vcmp.eq.s32.totalorder %v74, %v84
    %vm99 = vcmp.eq.s32.totalorder %v77, %v84
    %vm100 = vcmp.eq.s32.totalorder %v80, %v84
    %v101 = vsel %vm85, 1, 0
    %v102 = vsel %vm86, 1, 0
    %v103 = vsel %vm87, 1, 0
    %v104 = vsel %vm88, 1, 0
    %v105 = vsel %vm89, 1, 0
    %v106 = vsel %vm90, 1, 0
    %v107 = vsel %vm91, 1, 0
    %v108 = vsel %vm92, 1, 0
    %v109 = vsel %vm93, 1, 0
    %v110 = vsel %vm94, 1, 0
    %v111 = vsel %vm95, 1, 0
    %v112 = vsel %vm96, 1, 0
    %v113 = vsel %vm97, 1, 0
    %v114 = vsel %vm98, 1, 0
    %v115 = vsel %vm99, 1, 0
    %v116 = vsel %vm100, 1, 0
    %v117 = vcvt.s32.f32 %v101
    %v118 = vcvt.s32.f32 %v102
    %v119 = vcvt.s32.f32 %v103
    %v120 = vcvt.s32.f32 %v104
    %v121 = vcvt.s32.f32 %v105
    %v122 = vcvt.s32.f32 %v106
    %v123 = vcvt.s32.f32 %v107
    %v124 = vcvt.s32.f32 %v108
    %v125 = vcvt.s32.f32 %v109
    %v126 = vcvt.s32.f32 %v110
    %v127 = vcvt.s32.f32 %v111
    %v128 = vcvt.s32.f32 %v112
    %v129 = vcvt.s32.f32 %v113
    %v130 = vcvt.s32.f32 %v114
    %v131 = vcvt.s32.f32 %v115
    %v132 = vcvt.s32.f32 %v116
    %133 = vmatprep.subr.mxu0 0.0
    %134 = vmatpush1.msra.mxu0 %v117
    %135 = vmatprep.subr.mxu0 0.0
    %136 = vmatpush1.msra.mxu0 %v118
    %137 = vmatprep.subr.mxu0 0.0
    %138 = vmatpush1.msra.mxu0 %v119
    %139 = vmatprep.subr.mxu0 0.0
    %140 = vmatpush1.msra.mxu0 %v120
    %141 = vmatprep.subr.mxu0 0.0
    %142 = vmatpush1.msra.mxu0 %v121
    %143 = vmatprep.subr.mxu0 0.0
    %144 = vmatpush1.msra.mxu0 %v122
    %145 = vmatprep.subr.mxu0 0.0
    %146 = vmatpush1.msra.mxu0 %v123
    %147 = vmatprep.subr.mxu0 0.0
    %148 = vmatpush1.msra.mxu0 %v124
    %149 = vmatprep.subr.mxu0 0.0
    %150 = vmatpush1.msra.mxu0 %v125
    %151 = vmatprep.subr.mxu0 0.0
    %152 = vmatpush1.msra.mxu0 %v126
    %153 = vmatprep.subr.mxu0 0.0
    %154 = vmatpush1.msra.mxu0 %v127
    %155 = vmatprep.subr.mxu0 0.0
    %156 = vmatpush1.msra.mxu0 %v128
    %157 = vmatprep.subr.mxu0 0.0
    %158 = vmatpush1.msra.mxu0 %v129
    %159 = vmatprep.subr.mxu0 0.0
    %160 = vmatpush1.msra.mxu0 %v130
    %161 = vmatprep.subr.mxu0 0.0
    %162 = vmatpush1.msra.mxu0 %v131
    %163 = vmatprep.subr.mxu0 0.0
    %164 = vmatpush1.msra.mxu0 %v132
    %165 = vmatprep.subr.mxu0 0.0
    %166 = vmatpush1.msra.mxu0 0.0
    %167 = vmatprep.subr.mxu0 0.0
    %168 = vmatpush1.msra.mxu0 0.0
    %169 = vmatprep.subr.mxu0 0.0
    %170 = vmatpush1.msra.mxu0 0.0
    %171 = vmatprep.subr.mxu0 0.0
    %172 = vmatpush1.msra.mxu0 0.0
    %173 = vmatprep.subr.mxu0 0.0
    %174 = vmatpush1.msra.mxu0 0.0
    %175 = vmatprep.subr.mxu0 0.0
    %176 = vmatpush1.msra.mxu0 0.0
    %177 = vmatprep.subr.mxu0 0.0
    %178 = vmatpush1.msra.mxu0 0.0
    %179 = vmatprep.subr.mxu0 0.0
    %180 = vmatpush1.msra.mxu0 0.0
    %181 = vmatprep.subr.mxu0 0.0
    %182 = vmatpush1.msra.mxu0 0.0
    %183 = vmatprep.subr.mxu0 0.0
    %184 = vmatpush1.msra.mxu0 0.0
    %185 = vmatprep.subr.mxu0 0.0
    %186 = vmatpush1.msra.mxu0 0.0
    %187 = vmatprep.subr.mxu0 0.0
    %188 = vmatpush1.msra.mxu0 0.0
    %189 = vmatprep.subr.mxu0 0.0
    %190 = vmatpush1.msra.mxu0 0.0
    %191 = vmatprep.subr.mxu0 0.0
    %192 = vmatpush1.msra.mxu0 0.0
    %193 = vmatprep.subr.mxu0 0.0
    %194 = vmatpush1.msra.mxu0 0.0
    %195 = vmatprep.subr.mxu0 0.0
    %196 = vmatpush1.msra.mxu0 0.0
    %197 = vmatprep.mubr.f32.mxu0 0.0
    %198 = vmatmul.mubr.f32.gmra.mrb[0].mxu0 %v31
    %v199 = vpop.f32.mrb[0].mxu0
    %v200 = vadd.f32 0.0, %v199
    %v201 = vpop.f32.mrb[0].mxu0
    %202 = vdwg.mxu0
    %203 = vst [vmem:[#allocation2] sm:$0xff] %v200
    // Predicated region
    $region14: #{tpu_custom_call.1} parent=1 // pred_check
      _
    $region15: #{tpu_custom_call.1} parent=1 // pred_check_branch
      %205 = sbr.rel (0) target = $region17
    $region16: #{tpu_custom_call.1} parent=1 // pred_region
      %s207 = ssub.s32 128, 128
      %208 = vsyncadd [#allocation3], %s207
      %s210 = sshll.u32 [#allocation2], 4
      %s211 = int_to_ptr.vmem [resolvable:$true] %s210
      %213 = dma.vmem_to_hbm [thread:$0]  %s211, 128, %s3, [#allocation3]
    $region17: #{tpu_custom_call.1} parent=1 // pred_fallthru
      _
    // Predicated region
    $region18: #{tpu_custom_call.1} parent=1 // pred_check
      _
    $region19: #{tpu_custom_call.1} parent=1 // pred_check_branch
      %215 = sbr.rel (0) target = $region21
    $region20: #{tpu_custom_call.1} parent=1 // pred_region
      %216 = dma.done [#allocation3], 128
    $region21: #{tpu_custom_call.1} parent=1 // pred_fallthru
      _
    %217 = vsyncpa [#allocation3], 1

// kernel: tpu_custom_call.1
$region0: #{tpu_custom_call.1}
  #allocation0 [shape = 'u32[]', space=smem, size = 0x4, offset = 0x4, fixed_abs, tag = 'smem constant byte address 0x4 - core index']
  #allocation1 [shape = 'u32[144,128]{1,0:T(1,128)}', space=vmem, size = 0x12000, scoped, tag = 'internal scratch']
  %s0 = inlined_call_operand.vmem [shape: s32[1,128], index: 0, kind: input, shape index: {}]
  %s1 = inlined_call_operand.vmem [shape: s32[128,1], index: 1, kind: input, shape index: {}]
  %s2 = inlined_call_operand.vmem [shape: f32[8,128], index: 2, kind: input, shape index: {}]
  %s3 = inlined_call_operand.hbm [shape: f32[8,128], index: 3, kind: output, shape index: {}]
  %s4 = sld [smem:[#allocation0]]
  $region22: #{tpu_custom_call.1} parent=0
    _
  %s6 = ssub.s32 1, %s4
  %s7 = scalar_select 0, %s6, %s4
  $region1: #{tpu_custom_call.1} parent=0
    #allocation2 [shape = 'u8[4096]{0}', space=vmem, size = 0x1000, scoped, tag = 'output window, operand 0, single buffered']
    #allocation3 [shape = 's32[1]{0}', space=sflag, size = 0x4, scoped, tag = 'scoped memory for tpu_custom_call.1']
    %8 = vsyncpa [#allocation3], 0
    // Predicated region
    $region2: #{tpu_custom_call.1} parent=1 // pred_check
      _
    $region3: #{tpu_custom_call.1} parent=1 // pred_check_branch
      %10 = sbr.rel (0) target = $region5
    $region4: #{tpu_custom_call.1} parent=1 // pred_region
      _
    $region5: #{tpu_custom_call.1} parent=1 // pred_fallthru
      _
    // Predicated region
    $region6: #{tpu_custom_call.1} parent=1 // pred_check
      _
    $region7: #{tpu_custom_call.1} parent=1 // pred_check_branch
      %12 = sbr.rel (0) target = $region9
    $region8: #{tpu_custom_call.1} parent=1 // pred_region
      _
    $region9: #{tpu_custom_call.1} parent=1 // pred_fallthru
      _
    // Predicated region
    $region10: #{tpu_custom_call.1} parent=1 // pred_check
      _
    $region11: #{tpu_custom_call.1} parent=1 // pred_check_branch
      %14 = sbr.rel (0) target = $region13
    $region12: #{tpu_custom_call.1} parent=1 // pred_region
      _
    $region13: #{tpu_custom_call.1} parent=1 // pred_fallthru
      _
    %v15 = vld [vmem:[%s1] sm:$0xff]
    %v16 = vld [vmem:[%s1 + $0x8] sm:$0xff]
    %v17 = vld [vmem:[%s1 + $0x10] sm:$0xff]
    %v18 = vld [vmem:[%s1 + $0x18] sm:$0xff]
    %v19 = vld [vmem:[%s1 + $0x20] sm:$0xff]
    %v20 = vld [vmem:[%s1 + $0x28] sm:$0xff]
    %v21 = vld [vmem:[%s1 + $0x30] sm:$0xff]
    %v22 = vld [vmem:[%s1 + $0x38] sm:$0xff]
    %v23 = vld [vmem:[%s1 + $0x40] sm:$0xff]
    %v24 = vld [vmem:[%s1 + $0x48] sm:$0xff]
    %v25 = vld [vmem:[%s1 + $0x50] sm:$0xff]
    %v26 = vld [vmem:[%s1 + $0x58] sm:$0xff]
    %v27 = vld [vmem:[%s1 + $0x60] sm:$0xff]
    %v28 = vld [vmem:[%s1 + $0x68] sm:$0xff]
    %v29 = vld [vmem:[%s1 + $0x70] sm:$0xff]
    %v30 = vld [vmem:[%s1 + $0x78] sm:$0xff]
    %v31 = vld [vmem:[%s2] sm:$0xff]
    %v32 = vld [vmem:[%s0] sm:$0x1]
    %33 = vset.pattern.permute.xlu0 0
    %34 = vperm.xlu0 %33, %v15
    %v35 = vpop.permute.xlu0 %34
    %36 = vset.pattern.permute.xlu0 0
    %37 = vperm.xlu0 %36, %v16
    %v38 = vpop.permute.xlu0 %37
    %39 = vset.pattern.permute.xlu0 0
    %40 = vperm.xlu0 %39, %v17
    %v41 = vpop.permute.xlu0 %40
    %42 = vset.pattern.permute.xlu0 0
    %43 = vperm.xlu0 %42, %v18
    %v44 = vpop.permute.xlu0 %43
    %45 = vset.pattern.permute.xlu0 0
    %46 = vperm.xlu0 %45, %v19
    %v47 = vpop.permute.xlu0 %46
    %48 = vset.pattern.permute.xlu0 0
    %49 = vperm.xlu0 %48, %v20
    %v50 = vpop.permute.xlu0 %49
    %51 = vset.pattern.permute.xlu0 0
    %52 = vperm.xlu0 %51, %v21
    %v53 = vpop.permute.xlu0 %52
    %54 = vset.pattern.permute.xlu0 0
    %55 = vperm.xlu0 %54, %v22
    %v56 = vpop.permute.xlu0 %55
    %57 = vset.pattern.permute.xlu0 0
    %58 = vperm.xlu0 %57, %v23
    %v59 = vpop.permute.xlu0 %58
    %60 = vset.pattern.permute.xlu0 0
    %61 = vperm.xlu0 %60, %v24
    %v62 = vpop.permute.xlu0 %61
    %63 = vset.pattern.permute.xlu0 0
    %64 = vperm.xlu0 %63, %v25
    %v65 = vpop.permute.xlu0 %64
    %66 = vset.pattern.permute.xlu0 0
    %67 = vperm.xlu0 %66, %v26
    %v68 = vpop.permute.xlu0 %67
    %69 = vset.pattern.permute.xlu0 0
    %70 = vperm.xlu0 %69, %v27
    %v71 = vpop.permute.xlu0 %70
    %72 = vset.pattern.permute.xlu0 0
    %73 = vperm.xlu0 %72, %v28
    %v74 = vpop.permute.xlu0 %73
    %75 = vset.pattern.permute.xlu0 0
    %76 = vperm.xlu0 %75, %v29
    %v77 = vpop.permute.xlu0 %76
    %78 = vset.pattern.permute.xlu0 0
    %79 = vperm.xlu0 %78, %v30
    %v80 = vpop.permute.xlu0 %79
    %v81 = vlaneseq
    %v82 = vshrl.u32 %v81, 7
    %v83 = vsub.s32 0, %v82
    %v84 = vrot.slane %v32, %v83
    %vm85 = vcmp.eq.s32.totalorder %v35, %v84
    %vm86 = vcmp.eq.s32.totalorder %v38, %v84
    %vm87 = vcmp.eq.s32.totalorder %v41, %v84
    %vm88 = vcmp.eq.s32.totalorder %v44, %v84
    %vm89 = vcmp.eq.s32.totalorder %v47, %v84
    %vm90 = vcmp.eq.s32.totalorder %v50, %v84
    %vm91 = vcmp.eq.s32.totalorder %v53, %v84
    %vm92 = vcmp.eq.s32.totalorder %v56, %v84
    %vm93 = vcmp.eq.s32.totalorder %v59, %v84
    %vm94 = vcmp.eq.s32.totalorder %v62, %v84
    %vm95 = vcmp.eq.s32.totalorder %v65, %v84
    %vm96 = vcmp.eq.s32.totalorder %v68, %v84
    %vm97 = vcmp.eq.s32.totalorder %v71, %v84
    %vm98 = vcmp.eq.s32.totalorder %v74, %v84
    %vm99 = vcmp.eq.s32.totalorder %v77, %v84
    %vm100 = vcmp.eq.s32.totalorder %v80, %v84
    %v101 = vsel %vm85, 1, 0
    %v102 = vsel %vm86, 1, 0
    %v103 = vsel %vm87, 1, 0
    %v104 = vsel %vm88, 1, 0
    %v105 = vsel %vm89, 1, 0
    %v106 = vsel %vm90, 1, 0
    %v107 = vsel %vm91, 1, 0
    %v108 = vsel %vm92, 1, 0
    %v109 = vsel %vm93, 1, 0
    %v110 = vsel %vm94, 1, 0
    %v111 = vsel %vm95, 1, 0
    %v112 = vsel %vm96, 1, 0
    %v113 = vsel %vm97, 1, 0
    %v114 = vsel %vm98, 1, 0
    %v115 = vsel %vm99, 1, 0
    %v116 = vsel %vm100, 1, 0
    %v117 = vcvt.s32.f32 %v101
    %v118 = vcvt.s32.f32 %v102
    %v119 = vcvt.s32.f32 %v103
    %v120 = vcvt.s32.f32 %v104
    %v121 = vcvt.s32.f32 %v105
    %v122 = vcvt.s32.f32 %v106
    %v123 = vcvt.s32.f32 %v107
    %v124 = vcvt.s32.f32 %v108
    %v125 = vcvt.s32.f32 %v109
    %v126 = vcvt.s32.f32 %v110
    %v127 = vcvt.s32.f32 %v111
    %v128 = vcvt.s32.f32 %v112
    %v129 = vcvt.s32.f32 %v113
    %v130 = vcvt.s32.f32 %v114
    %v131 = vcvt.s32.f32 %v115
    %v132 = vcvt.s32.f32 %v116
    %133 = vmatprep.subr.mxu0 0.0
    %134 = vmatpush1.msra.mxu0 %v117
    %135 = vmatprep.subr.mxu0 0.0
    %136 = vmatpush1.msra.mxu0 %v118
    %137 = vmatprep.subr.mxu0 0.0
    %138 = vmatpush1.msra.mxu0 %v119
    %139 = vmatprep.subr.mxu0 0.0
    %140 = vmatpush1.msra.mxu0 %v120
    %141 = vmatprep.subr.mxu0 0.0
    %142 = vmatpush1.msra.mxu0 %v121
    %143 = vmatprep.subr.mxu0 0.0
    %144 = vmatpush1.msra.mxu0 %v122
    %145 = vmatprep.subr.mxu0 0.0
    %146 = vmatpush1.msra.mxu0 %v123
    %147 = vmatprep.subr.mxu0 0.0
    %148 = vmatpush1.msra.mxu0 %v124
    %149 = vmatprep.subr.mxu0 0.0
    %150 = vmatpush1.msra.mxu0 %v125
    %151 = vmatprep.subr.mxu0 0.0
    %152 = vmatpush1.msra.mxu0 %v126
    %153 = vmatprep.subr.mxu0 0.0
    %154 = vmatpush1.msra.mxu0 %v127
    %155 = vmatprep.subr.mxu0 0.0
    %156 = vmatpush1.msra.mxu0 %v128
    %157 = vmatprep.subr.mxu0 0.0
    %158 = vmatpush1.msra.mxu0 %v129
    %159 = vmatprep.subr.mxu0 0.0
    %160 = vmatpush1.msra.mxu0 %v130
    %161 = vmatprep.subr.mxu0 0.0
    %162 = vmatpush1.msra.mxu0 %v131
    %163 = vmatprep.subr.mxu0 0.0
    %164 = vmatpush1.msra.mxu0 %v132
    %165 = vmatprep.subr.mxu0 0.0
    %166 = vmatpush1.msra.mxu0 0.0
    %167 = vmatprep.subr.mxu0 0.0
    %168 = vmatpush1.msra.mxu0 0.0
    %169 = vmatprep.subr.mxu0 0.0
    %170 = vmatpush1.msra.mxu0 0.0
    %171 = vmatprep.subr.mxu0 0.0
    %172 = vmatpush1.msra.mxu0 0.0
    %173 = vmatprep.subr.mxu0 0.0
    %174 = vmatpush1.msra.mxu0 0.0
    %175 = vmatprep.subr.mxu0 0.0
    %176 = vmatpush1.msra.mxu0 0.0
    %177 = vmatprep.subr.mxu0 0.0
    %178 = vmatpush1.msra.mxu0 0.0
    %179 = vmatprep.subr.mxu0 0.0
    %180 = vmatpush1.msra.mxu0 0.0
    %181 = vmatprep.subr.mxu0 0.0
    %182 = vmatpush1.msra.mxu0 0.0
    %183 = vmatprep.subr.mxu0 0.0
    %184 = vmatpush1.msra.mxu0 0.0
    %185 = vmatprep.subr.mxu0 0.0
    %186 = vmatpush1.msra.mxu0 0.0
    %187 = vmatprep.subr.mxu0 0.0
    %188 = vmatpush1.msra.mxu0 0.0
    %189 = vmatprep.subr.mxu0 0.0
    %190 = vmatpush1.msra.mxu0 0.0
    %191 = vmatprep.subr.mxu0 0.0
    %192 = vmatpush1.msra.mxu0 0.0
    %193 = vmatprep.subr.mxu0 0.0
    %194 = vmatpush1.msra.mxu0 0.0
    %195 = vmatprep.subr.mxu0 0.0
    %196 = vmatpush1.msra.mxu0 0.0
    %197 = vmatprep.mubr.f32.mxu0 0.0
    %198 = vmatmul.mubr.f32.gmra.mrb[0].mxu0 %v31
    %v199 = vpop.f32.mrb[0].mxu0
    %v200 = vadd.f32 0.0, %v199
    %v201 = vpop.f32.mrb[0].mxu0
    %202 = vdwg.mxu0
    %203 = vst [vmem:[#allocation2] sm:$0xff] %v200
    // Predicated region
    $region14: #{tpu_custom_call.1} parent=1 // pred_check
      _
    $region15: #{tpu_custom_call.1} parent=1 // pred_check_branch
      %205 = sbr.rel (0) target = $region17
    $region16: #{tpu_custom_call.1} parent=1 // pred_region
      %s207 = ssub.s32 128, 128
      %208 = vsyncadd [#allocation3], %s207
      %s210 = sshll.u32 [#allocation2], 4
      %s211 = int_to_ptr.vmem [resolvable:$true] %s210
      %213 = dma.vmem_to_hbm [thread:$0]  %s211, 128, %s3, [#allocation3]
    $region17: #{tpu_custom_call.1} parent=1 // pred_fallthru
      _
    // Predicated region
    $region18: #{tpu_custom_call.1} parent=1 // pred_check
      _
    $region19: #{tpu_custom_call.1} parent=1 // pred_check_branch
      %215 = sbr.rel (0) target = $region21
    $region20: #{tpu_custom_call.1} parent=1 // pred_region
      %216 = dma.done [#allocation3], 128
    $region21: #{tpu_custom_call.1} parent=1 // pred_fallthru
      _
    %217 = vsyncpa [#allocation3], 1

</llo_original>
